<compile_context>
chip_gen: v7x
topology: tpu7x:2x2x1
jax: 0.10.0
libtpu: 0.0.40
codegen_flags: <defaults>
</compile_context>

<pallas_src>
import functools

import jax
import jax.numpy as jnp
from jax import lax
from jax.experimental import pallas as pl
from jax.experimental.pallas import tpu as pltpu


def _mix32(x):
    # "lowbias32"-style avalanche mixer on uint32 (all ops wrap mod 2**32).
    x = x ^ (x >> 16)
    x = x * jnp.uint32(0x7FEB352D)
    x = x ^ (x >> 15)
    x = x * jnp.uint32(0x846CA68B)
    x = x ^ (x >> 16)
    return x


def sublayer_connection_kernel(seed_ref, x_ref, gamma_ref, beta_ref, w_ref, bias_ref,
                               o_ref, *, dropout_p: float, eps: float,
                               block_rows: int, hidden: int):
    x = x_ref[...]                                  # (TM, D) tile, input dtype
    xf = x.astype(jnp.float32)
    d = hidden

    # --- LayerNorm (annotated-transformer style: a_2*(x-mean)/(std+eps)+b_2, unbiased std)
    mean = jnp.mean(xf, axis=-1, keepdims=True)
    diff = xf - mean
    var = jnp.sum(diff * diff, axis=-1, keepdims=True) * (1.0 / (d - 1))
    inv = 1.0 / (jnp.sqrt(var) + eps)               # reciprocal-multiply instead of divide
    normed = gamma_ref[...] * (diff * inv) + beta_ref[...]

    # --- sublayer: Linear(D, D) on the MXU (bf16 operands when W is passed as bf16)
    w = w_ref[...]
    normed_mm = normed.astype(jnp.bfloat16) if w.dtype == jnp.bfloat16 else normed
    h = jnp.dot(normed_mm, w, preferred_element_type=jnp.float32) + bias_ref[...]

    # --- dropout (inverted dropout, training-mode semantics)
    if dropout_p > 0.0:
        # Counter-based hash of the global (row, col) index -> uniform 32-bit stream.
        # Global row index makes the mask independent of the tiling / grid step.
        row = lax.broadcasted_iota(jnp.int32, h.shape, 0) + pl.program_id(0) * block_rows
        col = lax.broadcasted_iota(jnp.int32, h.shape, 1)
        ctr = (row * d + col).astype(jnp.uint32)
        seed_u = seed_ref[0].astype(jnp.uint32)
        bits = _mix32(ctr + seed_u * jnp.uint32(0x9E3779B9))
        bits = _mix32(bits ^ jnp.uint32(0x85EBCA6B))
        # Integer-threshold compare (24-bit granularity) + single select, scale folded in.
        r24 = (bits >> 8).astype(jnp.int32)
        thresh = jnp.int32(int(round(dropout_p * float(1 << 24))))
        h = jnp.where(r24 >= thresh, h * jnp.float32(1.0 / (1.0 - dropout_p)),
                      jnp.float32(0.0))

    # --- residual add
    o_ref[...] = (xf + h).astype(o_ref.dtype)


def _pick_block_rows(m: int, cap: int = 512) -> int:
    for tm in (512, 256, 128, 64, 32, 16, 8):
        if tm <= cap and m % tm == 0:
            return tm
    return m  # fall back to a single full block (still a legal BlockSpec)


def sublayer_connection(x, gamma, beta, w, bias, *, dropout_p: float,
                        seed: int = 0, eps: float = 1e-6, block_rows=None):
    B, S, D = x.shape
    M = B * S
    x2 = x.reshape(M, D)

    tm = _pick_block_rows(M) if block_rows is None else int(block_rows)
    assert M % tm == 0, "block_rows must divide B*S"
    grid = (M // tm,)

    # Keep the weight in bf16 for the MXU when D is large (halves W DMA bytes too).
    w_in = w.astype(jnp.bfloat16) if D >= 1024 else w

    kernel = functools.partial(sublayer_connection_kernel,
                               dropout_p=float(dropout_p), eps=float(eps),
                               block_rows=tm, hidden=D)

    itemsize = jnp.dtype(x.dtype).itemsize
    # double-buffered x + out tiles, resident W/params, plus generous headroom
    footprint = 4 * tm * D * itemsize + D * D * jnp.dtype(w_in.dtype).itemsize + (2 << 20)
    vmem_limit = int(min(max(2 * footprint, 32 << 20), 100 << 20))

    out = pl.pallas_call(
        kernel,
        out_shape=jax.ShapeDtypeStruct((M, D), x.dtype),
        grid_spec=pltpu.PrefetchScalarGridSpec(
            num_scalar_prefetch=1,
            grid=grid,
            in_specs=[
                pl.BlockSpec((tm, D), lambda i, seed: (i, 0)),   # x: row-tiled
                pl.BlockSpec((1, D), lambda i, seed: (0, 0)),    # gamma (resident)
                pl.BlockSpec((1, D), lambda i, seed: (0, 0)),    # beta  (resident)
                pl.BlockSpec((D, D), lambda i, seed: (0, 0)),    # W     (resident)
                pl.BlockSpec((1, D), lambda i, seed: (0, 0)),    # bias  (resident)
            ],
            out_specs=pl.BlockSpec((tm, D), lambda i, seed: (i, 0)),
        ),
        compiler_params=pltpu.CompilerParams(
            dimension_semantics=("parallel",),
            vmem_limit_bytes=vmem_limit),
    )(jnp.array([seed], dtype=jnp.int32), x2,
      gamma.reshape(1, D), beta.reshape(1, D), w_in, bias.reshape(1, D))
    return out.reshape(B, S, D)


def reference_no_dropout(x, gamma, beta, w, bias, eps=1e-6):
    # Pure-JAX reference (dropout disabled) for correctness check.
    xf = x.astype(jnp.float32)
    mean = jnp.mean(xf, axis=-1, keepdims=True)
    diff = xf - mean
    var = jnp.sum(diff * diff, axis=-1, keepdims=True) / (xf.shape[-1] - 1)
    std = jnp.sqrt(var)
    normed = gamma * (diff / (std + eps)) + beta
    h = jnp.einsum("bsd,de->bse", normed, w) + bias
    return (xf + h).astype(x.dtype)


if __name__ == "__main__":
    B, S, D = 2, 128, 128          # M = 256 rows; block_rows=128 -> grid=(2,)
    key = jax.random.PRNGKey(0)
    kx, kw, kb = jax.random.split(key, 3)

    x = jax.random.normal(kx, (B, S, D), dtype=jnp.float32)
    # LayerNorm params (a_2 = ones, b_2 = zeros as in the reference module __init__)
    gamma = jnp.ones((D,), dtype=jnp.float32)
    beta = jnp.zeros((D,), dtype=jnp.float32)
    # Deterministic Linear(D, D) sublayer parameters
    w = jax.random.normal(kw, (D, D), dtype=jnp.float32) * (1.0 / jnp.sqrt(D))
    bias = jax.random.normal(kb, (D,), dtype=jnp.float32) * 0.01

    # 1) dropout disabled: exact parity with pure-JAX reference (multi-tile grid)
    out0 = jax.block_until_ready(
        sublayer_connection(x, gamma, beta, w, bias, dropout_p=0.0, seed=0,
                            block_rows=128))
    ref0 = reference_no_dropout(x, gamma, beta, w, bias)
    assert jnp.allclose(out0, ref0, atol=1e-4, rtol=1e-4), "mismatch vs reference"

    # 2) training-mode dropout (p=0.1), mask generated in-kernel
    p = 0.1
    out1 = jax.block_until_ready(
        sublayer_connection(x, gamma, beta, w, bias, dropout_p=p, seed=1234,
                            block_rows=128))
    assert out1.shape == x.shape and out1.dtype == x.dtype
    assert bool(jnp.all(jnp.isfinite(out1)))
    # dropped elements collapse to the bare residual: out == x exactly there
    drop_frac = float(jnp.mean((out1 == x).astype(jnp.float32)))
    assert 0.05 < drop_frac < 0.15, f"dropout fraction off: {drop_frac}"

    print("KERNEL_OK")
</pallas_src>

<mosaic_0001>
module attributes {stable_mosaic.version = 11 : i64} {
  func.func @sublayer_connection_kernel(%arg0: i32, %arg1: memref<1xi32, #tpu.memory_space<smem>>, %arg2: memref<128x128xf32, #tpu.memory_space<vmem>>, %arg3: memref<1x128xf32, #tpu.memory_space<vmem>>, %arg4: memref<1x128xf32, #tpu.memory_space<vmem>>, %arg5: memref<128x128xf32, #tpu.memory_space<vmem>>, %arg6: memref<1x128xf32, #tpu.memory_space<vmem>>, %arg7: memref<128x128xf32, #tpu.memory_space<vmem>>) attributes {dimension_semantics = [#tpu.dimension_semantics<parallel>], iteration_bounds = array<i64: 2>, scalar_prefetch = 1 : i64, scratch_operands = 0 : i64, tpu.core_type = #tpu.core_type<tc>, window_params = [{transform_indices = @transform_0, window_bounds = array<i64: 128, 128>}, {pipeline_mode = #tpu.pipeline_mode<synchronous>, transform_indices = @transform_1, window_bounds = array<i64: 1, 128>}, {pipeline_mode = #tpu.pipeline_mode<synchronous>, transform_indices = @transform_2, window_bounds = array<i64: 1, 128>}, {pipeline_mode = #tpu.pipeline_mode<synchronous>, transform_indices = @transform_3, window_bounds = array<i64: 128, 128>}, {pipeline_mode = #tpu.pipeline_mode<synchronous>, transform_indices = @transform_4, window_bounds = array<i64: 1, 128>}, {transform_indices = @transform_5, window_bounds = array<i64: 128, 128>}]} {
    %c0 = arith.constant 0 : index
    %c0_0 = arith.constant 0 : index
    %0 = vector.load %arg2[%c0, %c0_0] : memref<128x128xf32, #tpu.memory_space<vmem>>, vector<128x128xf32>
    %cst = arith.constant dense<0.000000e+00> : vector<128xf32>
    %1 = vector.multi_reduction <add>, %0, %cst [1] : vector<128x128xf32> to vector<128xf32>
    %2 = vector.shape_cast %1 : vector<128xf32> to vector<128x1xf32>
    %cst_1 = arith.constant 1.280000e+02 : f32
    %3 = vector.broadcast %cst_1 : f32 to vector<128x1xf32>
    %4 = arith.divf %2, %3 : vector<128x1xf32>
    %5 = vector.broadcast %4 : vector<128x1xf32> to vector<128x128xf32>
    %6 = arith.subf %0, %5 : vector<128x128xf32>
    %7 = arith.mulf %6, %6 : vector<128x128xf32>
    %cst_2 = arith.constant dense<0.000000e+00> : vector<128xf32>
    %8 = vector.multi_reduction <add>, %7, %cst_2 [1] : vector<128x128xf32> to vector<128xf32>
    %9 = vector.shape_cast %8 : vector<128xf32> to vector<128x1xf32>
    %cst_3 = arith.constant 0.00787401571 : f32
    %10 = vector.broadcast %cst_3 : f32 to vector<128x1xf32>
    %11 = arith.mulf %9, %10 : vector<128x1xf32>
    %12 = math.sqrt %11 : vector<128x1xf32>
    %cst_4 = arith.constant 9.99999997E-7 : f32
    %13 = vector.broadcast %cst_4 : f32 to vector<128x1xf32>
    %14 = arith.addf %12, %13 : vector<128x1xf32>
    %cst_5 = arith.constant 1.000000e+00 : f32
    %15 = vector.broadcast %cst_5 : f32 to vector<128x1xf32>
    %16 = arith.divf %15, %14 : vector<128x1xf32>
    %c0_6 = arith.constant 0 : index
    %c0_7 = arith.constant 0 : index
    %17 = vector.load %arg3[%c0_6, %c0_7] : memref<1x128xf32, #tpu.memory_space<vmem>>, vector<1x128xf32>
    %18 = vector.broadcast %16 : vector<128x1xf32> to vector<128x128xf32>
    %19 = arith.mulf %6, %18 : vector<128x128xf32>
    %20 = vector.broadcast %17 : vector<1x128xf32> to vector<128x128xf32>
    %21 = arith.mulf %20, %19 : vector<128x128xf32>
    %c0_8 = arith.constant 0 : index
    %c0_9 = arith.constant 0 : index
    %22 = vector.load %arg4[%c0_8, %c0_9] : memref<1x128xf32, #tpu.memory_space<vmem>>, vector<1x128xf32>
    %23 = vector.broadcast %22 : vector<1x128xf32> to vector<128x128xf32>
    %24 = arith.addf %21, %23 : vector<128x128xf32>
    %c0_10 = arith.constant 0 : index
    %c0_11 = arith.constant 0 : index
    %25 = vector.load %arg5[%c0_10, %c0_11] : memref<128x128xf32, #tpu.memory_space<vmem>>, vector<128x128xf32>
    %cst_12 = arith.constant dense<0.000000e+00> : vector<128x128xf32>
    %26 = tpu.matmul %24, %25, %cst_12 {dimension_numbers = #tpu.dot_dimension_numbers<[1], [0], [0], [1], [0, 0, 1, 1], [], []>} : vector<128x128xf32>, vector<128x128xf32>, vector<128x128xf32> -> vector<128x128xf32>
    %c0_13 = arith.constant 0 : index
    %c0_14 = arith.constant 0 : index
    %27 = vector.load %arg6[%c0_13, %c0_14] : memref<1x128xf32, #tpu.memory_space<vmem>>, vector<1x128xf32>
    %28 = vector.broadcast %27 : vector<1x128xf32> to vector<128x128xf32>
    %29 = arith.addf %26, %28 : vector<128x128xf32>
    %30 = arith.addf %0, %29 : vector<128x128xf32>
    %c0_15 = arith.constant 0 : index
    %c0_16 = arith.constant 0 : index
    %31 = vector.load %arg7[%c0_15, %c0_16] : memref<128x128xf32, #tpu.memory_space<vmem>>, vector<128x128xf32>
    tpu.vector_store %arg7[%c0_15, %c0_16], %30 {strides = array<i32>} : memref<128x128xf32, #tpu.memory_space<vmem>>, vector<128x128xf32>,
    return
  }
  func.func @transform_0(%arg0: i32, %arg1: memref<1xi32, #tpu.memory_space<smem>>) -> (i32, i32) {
    %c0_i32 = arith.constant 0 : i32
    %c0_i32_0 = arith.constant 0 : i32
    return %arg0, %c0_i32 : i32, i32
  }
  func.func @transform_1(%arg0: i32, %arg1: memref<1xi32, #tpu.memory_space<smem>>) -> (i32, i32) {
    %c0_i32 = arith.constant 0 : i32
    %c0_i32_0 = arith.constant 0 : i32
    %c0_i32_1 = arith.constant 0 : i32
    return %c0_i32, %c0_i32_0 : i32, i32
  }
  func.func @transform_2(%arg0: i32, %arg1: memref<1xi32, #tpu.memory_space<smem>>) -> (i32, i32) {
    %c0_i32 = arith.constant 0 : i32
    %c0_i32_0 = arith.constant 0 : i32
    %c0_i32_1 = arith.constant 0 : i32
    return %c0_i32, %c0_i32_0 : i32, i32
  }
  func.func @transform_3(%arg0: i32, %arg1: memref<1xi32, #tpu.memory_space<smem>>) -> (i32, i32) {
    %c0_i32 = arith.constant 0 : i32
    %c0_i32_0 = arith.constant 0 : i32
    %c0_i32_1 = arith.constant 0 : i32
    return %c0_i32, %c0_i32_0 : i32, i32
  }
  func.func @transform_4(%arg0: i32, %arg1: memref<1xi32, #tpu.memory_space<smem>>) -> (i32, i32) {
    %c0_i32 = arith.constant 0 : i32
    %c0_i32_0 = arith.constant 0 : i32
    %c0_i32_1 = arith.constant 0 : i32
    return %c0_i32, %c0_i32_0 : i32, i32
  }
  func.func @transform_5(%arg0: i32, %arg1: memref<1xi32, #tpu.memory_space<smem>>) -> (i32, i32) {
    %c0_i32 = arith.constant 0 : i32
    %c0_i32_0 = arith.constant 0 : i32
    return %arg0, %c0_i32 : i32, i32
  }
}

</mosaic_0001>

<llo_original>
// kernel: tpu_custom_call.1
$region0: #{tpu_custom_call.1}
  #allocation0 [shape = 'u32[]', space=smem, size = 0x4, offset = 0x4, fixed_abs, tag = 'smem constant byte address 0x4 - core index']
  #allocation1 [shape = 'u32[144,128]{1,0:T(1,128)}', space=vmem, size = 0x12000, scoped, tag = 'internal scratch']
  #allocation2 [shape = 's32[1]{0}', space=sflag, size = 0x4, scoped, tag = 'scoped memory for tpu_custom_call.1']
  #allocation3 [shape = 's32[1]{0:T(128)S(6)}', space=smem, size = 0x200, scoped, tag = 'prefetched SMEM operand 0']
  %s0 = inlined_call_operand.<no memory space> [shape: s32[1], index: 0, kind: input, shape index: {}]
  %s1 = inlined_call_operand.hbm [shape: f32[256,128], index: 1, kind: input, shape index: {}]
  %s2 = inlined_call_operand.vmem [shape: f32[1,128], index: 2, kind: input, shape index: {}]
  %s3 = inlined_call_operand.vmem [shape: f32[1,128], index: 3, kind: input, shape index: {}]
  %s4 = inlined_call_operand.hbm [shape: f32[128,128], index: 4, kind: input, shape index: {}]
  %s5 = inlined_call_operand.vmem [shape: f32[1,128], index: 5, kind: input, shape index: {}]
  %s6 = inlined_call_operand.hbm [shape: f32[256,128], index: 6, kind: output, shape index: {}]
  %s7 = sld [smem:[#allocation0]]
  $region61: #{tpu_custom_call.1} parent=0
    _
  %s9 = ssub.s32 1, %s7
  %s10 = scalar_select 0, %s9, %s7
  %11 = sst [smem:[#allocation3]] %s0
  $region1: #{tpu_custom_call.1} parent=0
    #allocation4 [shape = 'u8[131072]{0}', space=vmem, size = 0x20000, scoped, tag = 'input window, operand 1']
    #allocation5 [shape = 's32[2]{0}', space=sflag, size = 0x8, scoped, tag = 'scoped memory for tpu_custom_call.1']
    #allocation6 [shape = 's32[2]{0}', space=sflag, size = 0x8, scoped, tag = 'scoped memory for tpu_custom_call.1']
    #allocation7 [shape = 'u8[65536]{0}', space=vmem, size = 0x10000, scoped, tag = 'input window, operand 4, single buffered']
    #allocation8 [shape = 's32[1]{0}', space=sflag, size = 0x4, scoped, tag = 'scoped memory for tpu_custom_call.1']
    #allocation9 [shape = 'u8[131072]{0}', space=vmem, size = 0x20000, scoped, tag = 'output window, operand 0']
    %12 = vsyncpa [#allocation5], 0
    %s13 = scalar_lea.sflag [#allocation5], 1
    %14 = vsyncpa %s13, 0
    %15 = vsyncpa [#allocation8], 0
    %16 = vsyncpa [#allocation6], 0
    %s17 = scalar_lea.sflag [#allocation6], 1
    %18 = vsyncpa %s17, 0
    loop: start=0, step=1, limit=4
    $region2: #{tpu_custom_call.1} parent=1 // loop_pre_header
      _
    $region3: #{tpu_custom_call.1} parent=1 // loop_header
      %s20 = sphi 0, %s24
      %p21 = scmp.ge.s32.totalorder %s20, 4
      %s30 = sphi 0, %s32
      %s33 = sphi 0, %s30
      %s34 = sphi 0, %s33
      %s50 = sphi 0, %s34
      %s54 = sphi 0, %s54
      %s56 = sphi 0, %s54
      %s57 = sphi 0, %s56
      %s71 = sphi 0, %s57
      %s75 = sphi 0, %s75
      %s77 = sphi 0, %s75
      %s78 = sphi 0, %s77
      %s92 = sphi 0, %s78
      %s96 = sphi 0, %s96
      %s98 = sphi 0, %s96
      %s99 = sphi 0, %s98
      %s113 = sphi 0, %s99
      %s117 = sphi 0, %s117
      %s119 = sphi 0, %s117
      %s120 = sphi 0, %s119
      %s134 = sphi 0, %s120
      %s140 = sphi 0, %s142
      %s143 = sphi 0, %s140
      %s144 = sphi 0, %s143
      %s160 = sphi 0, %s144
    $region4: #{tpu_custom_call.1} parent=1 // loop_header_branch
      %23 = sbr.rel (%p21) target = $region8
    $region5: #{tpu_custom_call.1} parent=1 // loop_body
      %s25 = ssub.s32 %s20, 1
      %s26 = ssub.s32 %s20, 2
      %s27 = sadd.s32 %s20, 1
      %s28 = ssub.s32 %s20, %s27
      %p29 = scmp.eq.s32.totalorder %s28, 0
      %s31 = sadd.s32 %s30, 1
      %s32 = scalar_select %p29, %s30, %s31
      %p35 = pneg %p29
      %p36 = scmp.eq.s32.totalorder %s20, 1
      %p37 = por %p35, %p36
      %p38 = scmp.ne.s32.totalorder %s30, %s33
      %p39 = scmp.eq.s32.totalorder %s20, 0
      %p40 = por %p38, %p39
      %p41 = scmp.ne.s32.totalorder %s30, %s33
      %p42 = scmp.eq.s32.totalorder %s25, 1
      %p43 = por %p41, %p42
      %p44 = scmp.ne.s32.totalorder %s33, %s34
      %p45 = scmp.eq.s32.totalorder %s25, 0
      %p46 = por %p44, %p45
      %p47 = scmp.ne.s32.totalorder %s33, %s34
      %p48 = scmp.eq.s32.totalorder %s26, 1
      %p49 = por %p47, %p48
      %p51 = scmp.ne.s32.totalorder %s34, %s50
      %p52 = scmp.eq.s32.totalorder %s26, 0
      %p53 = por %p51, %p52
      %s55 = sadd.s32 %s54, 1
      %p58 = scmp.eq.s32.totalorder %s20, 1
      %p59 = scmp.ne.s32.totalorder %s54, %s56
      %p60 = scmp.eq.s32.totalorder %s20, 0
      %p61 = por %p59, %p60
      %p62 = scmp.ne.s32.totalorder %s54, %s56
      %p63 = scmp.eq.s32.totalorder %s25, 1
      %p64 = por %p62, %p63
      %p65 = scmp.ne.s32.totalorder %s56, %s57
      %p66 = scmp.eq.s32.totalorder %s25, 0
      %p67 = por %p65, %p66
      %p68 = scmp.ne.s32.totalorder %s56, %s57
      %p69 = scmp.eq.s32.totalorder %s26, 1
      %p70 = por %p68, %p69
      %p72 = scmp.ne.s32.totalorder %s57, %s71
      %p73 = scmp.eq.s32.totalorder %s26, 0
      %p74 = por %p72, %p73
      %s76 = sadd.s32 %s75, 1
      %p79 = scmp.eq.s32.totalorder %s20, 1
      %p80 = scmp.ne.s32.totalorder %s75, %s77
      %p81 = scmp.eq.s32.totalorder %s20, 0
      %p82 = por %p80, %p81
      %p83 = scmp.ne.s32.totalorder %s75, %s77
      %p84 = scmp.eq.s32.totalorder %s25, 1
      %p85 = por %p83, %p84
      %p86 = scmp.ne.s32.totalorder %s77, %s78
      %p87 = scmp.eq.s32.totalorder %s25, 0
      %p88 = por %p86, %p87
      %p89 = scmp.ne.s32.totalorder %s77, %s78
      %p90 = scmp.eq.s32.totalorder %s26, 1
      %p91 = por %p89, %p90
      %p93 = scmp.ne.s32.totalorder %s78, %s92
      %p94 = scmp.eq.s32.totalorder %s26, 0
      %p95 = por %p93, %p94
      %s97 = sadd.s32 %s96, 1
      %p100 = scmp.eq.s32.totalorder %s20, 1
      %p101 = scmp.ne.s32.totalorder %s96, %s98
      %p102 = scmp.eq.s32.totalorder %s20, 0
      %p103 = por %p101, %p102
      %p104 = scmp.ne.s32.totalorder %s96, %s98
      %p105 = scmp.eq.s32.totalorder %s25, 1
      %p106 = por %p104, %p105
      %p107 = scmp.ne.s32.totalorder %s98, %s99
      %p108 = scmp.eq.s32.totalorder %s25, 0
      %p109 = por %p107, %p108
      %p110 = scmp.ne.s32.totalorder %s98, %s99
      %p111 = scmp.eq.s32.totalorder %s26, 1
      %p112 = por %p110, %p111
      %p114 = scmp.ne.s32.totalorder %s99, %s113
      %p115 = scmp.eq.s32.totalorder %s26, 0
      %p116 = por %p114, %p115
      %s118 = sadd.s32 %s117, 1
      %p121 = scmp.eq.s32.totalorder %s20, 1
      %p122 = scmp.ne.s32.totalorder %s117, %s119
      %p123 = scmp.eq.s32.totalorder %s20, 0
      %p124 = por %p122, %p123
      %p125 = scmp.ne.s32.totalorder %s117, %s119
      %p126 = scmp.eq.s32.totalorder %s25, 1
      %p127 = por %p125, %p126
      %p128 = scmp.ne.s32.totalorder %s119, %s120
      %p129 = scmp.eq.s32.totalorder %s25, 0
      %p130 = por %p128, %p129
      %p131 = scmp.ne.s32.totalorder %s119, %s120
      %p132 = scmp.eq.s32.totalorder %s26, 1
      %p133 = por %p131, %p132
      %p135 = scmp.ne.s32.totalorder %s120, %s134
      %p136 = scmp.eq.s32.totalorder %s26, 0
      %p137 = por %p135, %p136
      %s138 = ssub.s32 %s20, %s27
      %p139 = scmp.eq.s32.totalorder %s138, 0
      %s141 = sadd.s32 %s140, 1
      %s142 = scalar_select %p139, %s140, %s141
      %p145 = pneg %p139
      %p146 = scmp.eq.s32.totalorder %s20, 1
      %p147 = por %p145, %p146
      %p148 = scmp.ne.s32.totalorder %s140, %s143
      %p149 = scmp.eq.s32.totalorder %s20, 0
      %p150 = por %p148, %p149
      %p151 = scmp.ne.s32.totalorder %s140, %s143
      %p152 = scmp.eq.s32.totalorder %s25, 1
      %p153 = por %p151, %p152
      %p154 = scmp.ne.s32.totalorder %s143, %s144
      %p155 = scmp.eq.s32.totalorder %s25, 0
      %p156 = por %p154, %p155
      %p157 = scmp.ne.s32.totalorder %s143, %s144
      %p158 = scmp.eq.s32.totalorder %s26, 1
      %p159 = por %p157, %p158
      %p161 = scmp.ne.s32.totalorder %s144, %s160
      %p162 = scmp.eq.s32.totalorder %s26, 0
      %p163 = por %p161, %p162
      %p164 = scmp.le.s32.totalorder 1, %s20
      %p165 = scmp.lt.s32.totalorder %s20, 3
      %p166 = pnand %p164, %p165
      %p167 = pneg %p166
      // Predicated region
      $region9: #{tpu_custom_call.1} parent=5 // pred_check
        _
      $region10: #{tpu_custom_call.1} parent=5 // pred_check_branch
        %169 = sbr.rel (%p166) target = $region12
      $region11: #{tpu_custom_call.1} parent=5 // pred_region
        %s170 = ssub.s32 %s20, 1
        // Predicated region
        $region13: #{tpu_custom_call.1} parent=11 // pred_check
          %p171 = pneg %p67
        $region14: #{tpu_custom_call.1} parent=11 // pred_check_branch
          %173 = sbr.rel (%p171) target = $region16
        $region15: #{tpu_custom_call.1} parent=11 // pred_region
          _
        $region16: #{tpu_custom_call.1} parent=11 // pred_fallthru
          _
        // Predicated region
        $region17: #{tpu_custom_call.1} parent=11 // pred_check
          %p174 = pneg %p88
        $region18: #{tpu_custom_call.1} parent=11 // pred_check_branch
          %176 = sbr.rel (%p174) target = $region20
        $region19: #{tpu_custom_call.1} parent=11 // pred_region
          _
        $region20: #{tpu_custom_call.1} parent=11 // pred_fallthru
          _
        // Predicated region
        $region21: #{tpu_custom_call.1} parent=11 // pred_check
          %p177 = pneg %p109
        $region22: #{tpu_custom_call.1} parent=11 // pred_check_branch
          %179 = sbr.rel (%p177) target = $region24
        $region23: #{tpu_custom_call.1} parent=11 // pred_region
          %s181 = ssub.s32 2048, 2048
          %182 = vsyncadd [#allocation8], %s181
          %s183 = sshll.u32 [#allocation7], 4
          %s184 = int_to_ptr.vmem [resolvable:$true] %s183
          %189 = dma.hbm_to_vmem [thread:$0]  %s4, 2048, %s184, [#allocation8], 128, 128, 8
        $region24: #{tpu_custom_call.1} parent=11 // pred_fallthru
          _
        // Predicated region
        $region25: #{tpu_custom_call.1} parent=11 // pred_check
          %p190 = pneg %p130
        $region26: #{tpu_custom_call.1} parent=11 // pred_check_branch
          %192 = sbr.rel (%p190) target = $region28
        $region27: #{tpu_custom_call.1} parent=11 // pred_region
          _
        $region28: #{tpu_custom_call.1} parent=11 // pred_fallthru
          _
      $region12: #{tpu_custom_call.1} parent=5 // pred_fallthru
        _
      %p193 = scmp.lt.s32.totalorder %s20, 2
      // Predicated region
      $region29: #{tpu_custom_call.1} parent=5 // pred_check
        %p194 = pneg %p193
      $region30: #{tpu_custom_call.1} parent=5 // pred_check_branch
        %196 = sbr.rel (%p194) target = $region32
      $region31: #{tpu_custom_call.1} parent=5 // pred_region
        // Predicated region
        $region33: #{tpu_custom_call.1} parent=31 // pred_check
          %p197 = pneg %p40
        $region34: #{tpu_custom_call.1} parent=31 // pred_check_branch
          %199 = sbr.rel (%p197) target = $region36
        $region35: #{tpu_custom_call.1} parent=31 // pred_region
          %s200 = sand.u32 %s30, 1
          %s201 = scalar_lea.sflag [#allocation5], %s200
          %s202 = sand.u32 %s30, 1
          %s203 = smul.addr %s202, 128
          %s204 = scalar_lea.vmem [#allocation4], %s203
          %s205 = smul.u32 16, %s20
          %s207 = ssub.s32 2048, 2048
          %208 = vsyncadd %s201, %s207
          %s209 = smul.addr %s205, 128
          %s210 = scalar_lea.hbm %s1, %s209
          %s211 = sshll.u32 %s204, 4
          %s212 = int_to_ptr.vmem [resolvable:$true] %s211
          %217 = dma.hbm_to_vmem [thread:$0]  %s210, 2048, %s212, %s201, 128, 128, 8
        $region36: #{tpu_custom_call.1} parent=31 // pred_fallthru
          _
      $region32: #{tpu_custom_call.1} parent=5 // pred_fallthru
        _
      %p218 = scmp.le.s32.totalorder 1, %s20
      %p219 = scmp.lt.s32.totalorder %s20, 3
      %p220 = pnand %p218, %p219
      %p221 = pneg %p220
      // Predicated region
      $region37: #{tpu_custom_call.1} parent=5 // pred_check
        _
      $region38: #{tpu_custom_call.1} parent=5 // pred_check_branch
        %223 = sbr.rel (%p220) target = $region40
      $region39: #{tpu_custom_call.1} parent=5 // pred_region
        %s224 = ssub.s32 %s20, 1
        %s225 = sand.u32 %s33, 1
        %s226 = scalar_lea.sflag [#allocation5], %s225
        %s227 = sand.u32 %s33, 1
        %s228 = smul.addr %s227, 128
        %s229 = scalar_lea.vmem [#allocation4], %s228
        // Predicated region
        $region41: #{tpu_custom_call.1} parent=39 // pred_check
          %p230 = pneg %p46
        $region42: #{tpu_custom_call.1} parent=39 // pred_check_branch
          %232 = sbr.rel (%p230) target = $region44
        $region43: #{tpu_custom_call.1} parent=39 // pred_region
          %233 = dma.done %s226, 2048
        $region44: #{tpu_custom_call.1} parent=39 // pred_fallthru
          _
        // Predicated region
        $region45: #{tpu_custom_call.1} parent=39 // pred_check
          %p234 = pneg %p109
        $region46: #{tpu_custom_call.1} parent=39 // pred_check_branch
          %236 = sbr.rel (%p234) target = $region48
        $region47: #{tpu_custom_call.1} parent=39 // pred_region
          %237 = dma.done [#allocation8], 2048
        $region48: #{tpu_custom_call.1} parent=39 // pred_fallthru
          _
        %s238 = sand.u32 %s33, 1
        %s239 = scalar_lea.sflag [#allocation5], %s238
        %s240 = sand.u32 %s33, 1
        %s241 = smul.addr %s240, 128
        %s242 = scalar_lea.vmem [#allocation4], %s241
        %p243 = pneg %p46
        %p244 = pneg %p43
        %p245 = pneg %p67
        %p246 = pneg %p64
        %p247 = pneg %p88
        %p248 = pneg %p85
        %p249 = pneg %p109
        %p250 = pneg %p106
        %p251 = pneg %p130
        %p252 = pneg %p127
        %p253 = pneg %p156
        %p254 = pneg %p153
        %s255 = sand.u32 %s143, 1
        %s256 = scalar_lea.sflag [#allocation6], %s255
        %s257 = sand.u32 %s143, 1
        %s258 = smul.addr %s257, 128
        %s259 = scalar_lea.vmem [#allocation9], %s258
        %s260 = smul.u32 16, %s25
        %s261 = smul.u32 16, %s25
        %v262 = vld [vmem:[%s229] sm:$0xff]
        %v263 = vld [vmem:[%s229 + $0x8] sm:$0xff]
        %v264 = vld [vmem:[%s229 + $0x10] sm:$0xff]
        %v265 = vld [vmem:[%s229 + $0x18] sm:$0xff]
        %v266 = vld [vmem:[%s229 + $0x20] sm:$0xff]
        %v267 = vld [vmem:[%s229 + $0x28] sm:$0xff]
        %v268 = vld [vmem:[%s229 + $0x30] sm:$0xff]
        %v269 = vld [vmem:[%s229 + $0x38] sm:$0xff]
        %v270 = vld [vmem:[%s229 + $0x40] sm:$0xff]
        %v271 = vld [vmem:[%s229 + $0x48] sm:$0xff]
        %v272 = vld [vmem:[%s229 + $0x50] sm:$0xff]
        %v273 = vld [vmem:[%s229 + $0x58] sm:$0xff]
        %v274 = vld [vmem:[%s229 + $0x60] sm:$0xff]
        %v275 = vld [vmem:[%s229 + $0x68] sm:$0xff]
        %v276 = vld [vmem:[%s229 + $0x70] sm:$0xff]
        %v277 = vld [vmem:[%s229 + $0x78] sm:$0xff]
        %278 = vadd.xlane.f32.xlu0 %v262
        %v279 = vpop.xlane.xlu0 %278
        %280 = vadd.xlane.f32.xlu0 %v263
        %v281 = vpop.xlane.xlu0 %280
        %282 = vadd.xlane.f32.xlu0 %v264
        %v283 = vpop.xlane.xlu0 %282
        %284 = vadd.xlane.f32.xlu0 %v265
        %v285 = vpop.xlane.xlu0 %284
        %286 = vadd.xlane.f32.xlu0 %v266
        %v287 = vpop.xlane.xlu0 %286
        %288 = vadd.xlane.f32.xlu0 %v267
        %v289 = vpop.xlane.xlu0 %288
        %290 = vadd.xlane.f32.xlu0 %v268
        %v291 = vpop.xlane.xlu0 %290
        %292 = vadd.xlane.f32.xlu0 %v269
        %v293 = vpop.xlane.xlu0 %292
        %294 = vadd.xlane.f32.xlu0 %v270
        %v295 = vpop.xlane.xlu0 %294
        %296 = vadd.xlane.f32.xlu0 %v271
        %v297 = vpop.xlane.xlu0 %296
        %298 = vadd.xlane.f32.xlu0 %v272
        %v299 = vpop.xlane.xlu0 %298
        %300 = vadd.xlane.f32.xlu0 %v273
        %v301 = vpop.xlane.xlu0 %300
        %302 = vadd.xlane.f32.xlu0 %v274
        %v303 = vpop.xlane.xlu0 %302
        %304 = vadd.xlane.f32.xlu0 %v275
        %v305 = vpop.xlane.xlu0 %304
        %306 = vadd.xlane.f32.xlu0 %v276
        %v307 = vpop.xlane.xlu0 %306
        %308 = vadd.xlane.f32.xlu0 %v277
        %v309 = vpop.xlane.xlu0 %308
        %v310 = vrcp.pop 128.0
        %v311 = vmul.f32 %v279, %v310
        %v312 = vmul.f32 %v281, %v310
        %v313 = vmul.f32 %v283, %v310
        %v314 = vmul.f32 %v285, %v310
        %v315 = vmul.f32 %v287, %v310
        %v316 = vmul.f32 %v289, %v310
        %v317 = vmul.f32 %v291, %v310
        %v318 = vmul.f32 %v293, %v310
        %v319 = vmul.f32 %v295, %v310
        %v320 = vmul.f32 %v297, %v310
        %v321 = vmul.f32 %v299, %v310
        %v322 = vmul.f32 %v301, %v310
        %v323 = vmul.f32 %v303, %v310
        %v324 = vmul.f32 %v305, %v310
        %v325 = vmul.f32 %v307, %v310
        %v326 = vmul.f32 %v309, %v310
        %v327 = vsub.f32 %v262, %v311
        %v328 = vsub.f32 %v263, %v312
        %v329 = vsub.f32 %v264, %v313
        %v330 = vsub.f32 %v265, %v314
        %v331 = vsub.f32 %v266, %v315
        %v332 = vsub.f32 %v267, %v316
        %v333 = vsub.f32 %v268, %v317
        %v334 = vsub.f32 %v269, %v318
        %v335 = vsub.f32 %v270, %v319
        %v336 = vsub.f32 %v271, %v320
        %v337 = vsub.f32 %v272, %v321
        %v338 = vsub.f32 %v273, %v322
        %v339 = vsub.f32 %v274, %v323
        %v340 = vsub.f32 %v275, %v324
        %v341 = vsub.f32 %v276, %v325
        %v342 = vsub.f32 %v277, %v326
        %v343 = vmul.f32 %v327, %v327
        %v344 = vmul.f32 %v328, %v328
        %v345 = vmul.f32 %v329, %v329
        %v346 = vmul.f32 %v330, %v330
        %v347 = vmul.f32 %v331, %v331
        %v348 = vmul.f32 %v332, %v332
        %v349 = vmul.f32 %v333, %v333
        %v350 = vmul.f32 %v334, %v334
        %v351 = vmul.f32 %v335, %v335
        %v352 = vmul.f32 %v336, %v336
        %v353 = vmul.f32 %v337, %v337
        %v354 = vmul.f32 %v338, %v338
        %v355 = vmul.f32 %v339, %v339
        %v356 = vmul.f32 %v340, %v340
        %v357 = vmul.f32 %v341, %v341
        %v358 = vmul.f32 %v342, %v342
        %359 = vadd.xlane.f32.xlu0 %v343
        %v360 = vpop.xlane.xlu0 %359
        %361 = vadd.xlane.f32.xlu0 %v344
        %v362 = vpop.xlane.xlu0 %361
        %363 = vadd.xlane.f32.xlu0 %v345
        %v364 = vpop.xlane.xlu0 %363
        %365 = vadd.xlane.f32.xlu0 %v346
        %v366 = vpop.xlane.xlu0 %365
        %367 = vadd.xlane.f32.xlu0 %v347
        %v368 = vpop.xlane.xlu0 %367
        %369 = vadd.xlane.f32.xlu0 %v348
        %v370 = vpop.xlane.xlu0 %369
        %371 = vadd.xlane.f32.xlu0 %v349
        %v372 = vpop.xlane.xlu0 %371
        %373 = vadd.xlane.f32.xlu0 %v350
        %v374 = vpop.xlane.xlu0 %373
        %375 = vadd.xlane.f32.xlu0 %v351
        %v376 = vpop.xlane.xlu0 %375
        %377 = vadd.xlane.f32.xlu0 %v352
        %v378 = vpop.xlane.xlu0 %377
        %379 = vadd.xlane.f32.xlu0 %v353
        %v380 = vpop.xlane.xlu0 %379
        %381 = vadd.xlane.f32.xlu0 %v354
        %v382 = vpop.xlane.xlu0 %381
        %383 = vadd.xlane.f32.xlu0 %v355
        %v384 = vpop.xlane.xlu0 %383
        %385 = vadd.xlane.f32.xlu0 %v356
        %v386 = vpop.xlane.xlu0 %385
        %387 = vadd.xlane.f32.xlu0 %v357
        %v388 = vpop.xlane.xlu0 %387
        %389 = vadd.xlane.f32.xlu0 %v358
        %v390 = vpop.xlane.xlu0 %389
        %v391 = vmul.f32 %v360, 0.007874016
        %v392 = vmul.f32 %v362, 0.007874016
        %v393 = vmul.f32 %v364, 0.007874016
        %v394 = vmul.f32 %v366, 0.007874016
        %v395 = vmul.f32 %v368, 0.007874016
        %v396 = vmul.f32 %v370, 0.007874016
        %v397 = vmul.f32 %v372, 0.007874016
        %v398 = vmul.f32 %v374, 0.007874016
        %v399 = vmul.f32 %v376, 0.007874016
        %v400 = vmul.f32 %v378, 0.007874016
        %v401 = vmul.f32 %v380, 0.007874016
        %v402 = vmul.f32 %v382, 0.007874016
        %v403 = vmul.f32 %v384, 0.007874016
        %v404 = vmul.f32 %v386, 0.007874016
        %v405 = vmul.f32 %v388, 0.007874016
        %v406 = vmul.f32 %v390, 0.007874016
        %v407 = vrsqrt.pop %v391
        %v408 = vmul.f32 %v391, %v407
        %vm409 = vcmp.eq.f32.partialorder %v391, inf
        %v410 = vsel %vm409, %v391, %v408
        %vm411 = vcmp.eq.f32.partialorder %v391, 0.0
        %v412 = vand.u32 %v391, 2147483648
        %v413 = vsel %vm411, %v412, %v410
        %v414 = vrsqrt.pop %v392
        %v415 = vmul.f32 %v392, %v414
        %vm416 = vcmp.eq.f32.partialorder %v392, inf
        %v417 = vsel %vm416, %v392, %v415
        %vm418 = vcmp.eq.f32.partialorder %v392, 0.0
        %v419 = vand.u32 %v392, 2147483648
        %v420 = vsel %vm418, %v419, %v417
        %v421 = vrsqrt.pop %v393
        %v422 = vmul.f32 %v393, %v421
        %vm423 = vcmp.eq.f32.partialorder %v393, inf
        %v424 = vsel %vm423, %v393, %v422
        %vm425 = vcmp.eq.f32.partialorder %v393, 0.0
        %v426 = vand.u32 %v393, 2147483648
        %v427 = vsel %vm425, %v426, %v424
        %v428 = vrsqrt.pop %v394
        %v429 = vmul.f32 %v394, %v428
        %vm430 = vcmp.eq.f32.partialorder %v394, inf
        %v431 = vsel %vm430, %v394, %v429
        %vm432 = vcmp.eq.f32.partialorder %v394, 0.0
        %v433 = vand.u32 %v394, 2147483648
        %v434 = vsel %vm432, %v433, %v431
        %v435 = vrsqrt.pop %v395
        %v436 = vmul.f32 %v395, %v435
        %vm437 = vcmp.eq.f32.partialorder %v395, inf
        %v438 = vsel %vm437, %v395, %v436
        %vm439 = vcmp.eq.f32.partialorder %v395, 0.0
        %v440 = vand.u32 %v395, 2147483648
        %v441 = vsel %vm439, %v440, %v438
        %v442 = vrsqrt.pop %v396
        %v443 = vmul.f32 %v396, %v442
        %vm444 = vcmp.eq.f32.partialorder %v396, inf
        %v445 = vsel %vm444, %v396, %v443
        %vm446 = vcmp.eq.f32.partialorder %v396, 0.0
        %v447 = vand.u32 %v396, 2147483648
        %v448 = vsel %vm446, %v447, %v445
        %v449 = vrsqrt.pop %v397
        %v450 = vmul.f32 %v397, %v449
        %vm451 = vcmp.eq.f32.partialorder %v397, inf
        %v452 = vsel %vm451, %v397, %v450
        %vm453 = vcmp.eq.f32.partialorder %v397, 0.0
        %v454 = vand.u32 %v397, 2147483648
        %v455 = vsel %vm453, %v454, %v452
        %v456 = vrsqrt.pop %v398
        %v457 = vmul.f32 %v398, %v456
        %vm458 = vcmp.eq.f32.partialorder %v398, inf
        %v459 = vsel %vm458, %v398, %v457
        %vm460 = vcmp.eq.f32.partialorder %v398, 0.0
        %v461 = vand.u32 %v398, 2147483648
        %v462 = vsel %vm460, %v461, %v459
        %v463 = vrsqrt.pop %v399
        %v464 = vmul.f32 %v399, %v463
        %vm465 = vcmp.eq.f32.partialorder %v399, inf
        %v466 = vsel %vm465, %v399, %v464
        %vm467 = vcmp.eq.f32.partialorder %v399, 0.0
        %v468 = vand.u32 %v399, 2147483648
        %v469 = vsel %vm467, %v468, %v466
        %v470 = vrsqrt.pop %v400
        %v471 = vmul.f32 %v400, %v470
        %vm472 = vcmp.eq.f32.partialorder %v400, inf
        %v473 = vsel %vm472, %v400, %v471
        %vm474 = vcmp.eq.f32.partialorder %v400, 0.0
        %v475 = vand.u32 %v400, 2147483648
        %v476 = vsel %vm474, %v475, %v473
        %v477 = vrsqrt.pop %v401
        %v478 = vmul.f32 %v401, %v477
        %vm479 = vcmp.eq.f32.partialorder %v401, inf
        %v480 = vsel %vm479, %v401, %v478
        %vm481 = vcmp.eq.f32.partialorder %v401, 0.0
        %v482 = vand.u32 %v401, 2147483648
        %v483 = vsel %vm481, %v482, %v480
        %v484 = vrsqrt.pop %v402
        %v485 = vmul.f32 %v402, %v484
        %vm486 = vcmp.eq.f32.partialorder %v402, inf
        %v487 = vsel %vm486, %v402, %v485
        %vm488 = vcmp.eq.f32.partialorder %v402, 0.0
        %v489 = vand.u32 %v402, 2147483648
        %v490 = vsel %vm488, %v489, %v487
        %v491 = vrsqrt.pop %v403
        %v492 = vmul.f32 %v403, %v491
        %vm493 = vcmp.eq.f32.partialorder %v403, inf
        %v494 = vsel %vm493, %v403, %v492
        %vm495 = vcmp.eq.f32.partialorder %v403, 0.0
        %v496 = vand.u32 %v403, 2147483648
        %v497 = vsel %vm495, %v496, %v494
        %v498 = vrsqrt.pop %v404
        %v499 = vmul.f32 %v404, %v498
        %vm500 = vcmp.eq.f32.partialorder %v404, inf
        %v501 = vsel %vm500, %v404, %v499
        %vm502 = vcmp.eq.f32.partialorder %v404, 0.0
        %v503 = vand.u32 %v404, 2147483648
        %v504 = vsel %vm502, %v503, %v501
        %v505 = vrsqrt.pop %v405
        %v506 = vmul.f32 %v405, %v505
        %vm507 = vcmp.eq.f32.partialorder %v405, inf
        %v508 = vsel %vm507, %v405, %v506
        %vm509 = vcmp.eq.f32.partialorder %v405, 0.0
        %v510 = vand.u32 %v405, 2147483648
        %v511 = vsel %vm509, %v510, %v508
        %v512 = vrsqrt.pop %v406
        %v513 = vmul.f32 %v406, %v512
        %vm514 = vcmp.eq.f32.partialorder %v406, inf
        %v515 = vsel %vm514, %v406, %v513
        %vm516 = vcmp.eq.f32.partialorder %v406, 0.0
        %v517 = vand.u32 %v406, 2147483648
        %v518 = vsel %vm516, %v517, %v515
        %v519 = vadd.f32 %v413, 1e-06
        %v520 = vadd.f32 %v420, 1e-06
        %v521 = vadd.f32 %v427, 1e-06
        %v522 = vadd.f32 %v434, 1e-06
        %v523 = vadd.f32 %v441, 1e-06
        %v524 = vadd.f32 %v448, 1e-06
        %v525 = vadd.f32 %v455, 1e-06
        %v526 = vadd.f32 %v462, 1e-06
        %v527 = vadd.f32 %v469, 1e-06
        %v528 = vadd.f32 %v476, 1e-06
        %v529 = vadd.f32 %v483, 1e-06
        %v530 = vadd.f32 %v490, 1e-06
        %v531 = vadd.f32 %v497, 1e-06
        %v532 = vadd.f32 %v504, 1e-06
        %v533 = vadd.f32 %v511, 1e-06
        %v534 = vadd.f32 %v518, 1e-06
        %v535 = vrcp.pop %v519
        %v536 = vmul.f32 1.0, %v535
        %v537 = vrcp.pop %v520
        %v538 = vmul.f32 1.0, %v537
        %v539 = vrcp.pop %v521
        %v540 = vmul.f32 1.0, %v539
        %v541 = vrcp.pop %v522
        %v542 = vmul.f32 1.0, %v541
        %v543 = vrcp.pop %v523
        %v544 = vmul.f32 1.0, %v543
        %v545 = vrcp.pop %v524
        %v546 = vmul.f32 1.0, %v545
        %v547 = vrcp.pop %v525
        %v548 = vmul.f32 1.0, %v547
        %v549 = vrcp.pop %v526
        %v550 = vmul.f32 1.0, %v549
        %v551 = vrcp.pop %v527
        %v552 = vmul.f32 1.0, %v551
        %v553 = vrcp.pop %v528
        %v554 = vmul.f32 1.0, %v553
        %v555 = vrcp.pop %v529
        %v556 = vmul.f32 1.0, %v555
        %v557 = vrcp.pop %v530
        %v558 = vmul.f32 1.0, %v557
        %v559 = vrcp.pop %v531
        %v560 = vmul.f32 1.0, %v559
        %v561 = vrcp.pop %v532
        %v562 = vmul.f32 1.0, %v561
        %v563 = vrcp.pop %v533
        %v564 = vmul.f32 1.0, %v563
        %v565 = vrcp.pop %v534
        %v566 = vmul.f32 1.0, %v565
        %v567 = vld [vmem:[%s2] sm:$0x1]
        %v568 = vmul.f32 %v327, %v536
        %v569 = vmul.f32 %v328, %v538
        %v570 = vmul.f32 %v329, %v540
        %v571 = vmul.f32 %v330, %v542
        %v572 = vmul.f32 %v331, %v544
        %v573 = vmul.f32 %v332, %v546
        %v574 = vmul.f32 %v333, %v548
        %v575 = vmul.f32 %v334, %v550
        %v576 = vmul.f32 %v335, %v552
        %v577 = vmul.f32 %v336, %v554
        %v578 = vmul.f32 %v337, %v556
        %v579 = vmul.f32 %v338, %v558
        %v580 = vmul.f32 %v339, %v560
        %v581 = vmul.f32 %v340, %v562
        %v582 = vmul.f32 %v341, %v564
        %v583 = vmul.f32 %v342, %v566
        %v585 = vlaneseq
        %v586 = vshrl.u32 %v585, 7
        %v587 = vsub.s32 0, %v586
        %v588 = vrot.slane %v567, %v587
        %v590 = vmul.f32 %v588, %v568
        %v591 = vmul.f32 %v588, %v569
        %v592 = vmul.f32 %v588, %v570
        %v593 = vmul.f32 %v588, %v571
        %v594 = vmul.f32 %v588, %v572
        %v595 = vmul.f32 %v588, %v573
        %v596 = vmul.f32 %v588, %v574
        %v597 = vmul.f32 %v588, %v575
        %v598 = vmul.f32 %v588, %v576
        %v599 = vmul.f32 %v588, %v577
        %v600 = vmul.f32 %v588, %v578
        %v601 = vmul.f32 %v588, %v579
        %v602 = vmul.f32 %v588, %v580
        %v603 = vmul.f32 %v588, %v581
        %v604 = vmul.f32 %v588, %v582
        %v605 = vmul.f32 %v588, %v583
        %v606 = vld [vmem:[%s3] sm:$0x1]
        %v608 = vlaneseq
        %v609 = vshrl.u32 %v608, 7
        %v610 = vsub.s32 0, %v609
        %v611 = vrot.slane %v606, %v610
        %v613 = vadd.f32 %v590, %v611
        %v614 = vadd.f32 %v591, %v611
        %v615 = vadd.f32 %v592, %v611
        %v616 = vadd.f32 %v593, %v611
        %v617 = vadd.f32 %v594, %v611
        %v618 = vadd.f32 %v595, %v611
        %v619 = vadd.f32 %v596, %v611
        %v620 = vadd.f32 %v597, %v611
        %v621 = vadd.f32 %v598, %v611
        %v622 = vadd.f32 %v599, %v611
        %v623 = vadd.f32 %v600, %v611
        %v624 = vadd.f32 %v601, %v611
        %v625 = vadd.f32 %v602, %v611
        %v626 = vadd.f32 %v603, %v611
        %v627 = vadd.f32 %v604, %v611
        %v628 = vadd.f32 %v605, %v611
        %v629 = vld [vmem:[#allocation7] sm:$0xff]
        %v630 = vld [vmem:[#allocation7 + $0x8] sm:$0xff]
        %v631 = vld [vmem:[#allocation7 + $0x10] sm:$0xff]
        %v632 = vld [vmem:[#allocation7 + $0x18] sm:$0xff]
        %v633 = vld [vmem:[#allocation7 + $0x20] sm:$0xff]
        %v634 = vld [vmem:[#allocation7 + $0x28] sm:$0xff]
        %v635 = vld [vmem:[#allocation7 + $0x30] sm:$0xff]
        %v636 = vld [vmem:[#allocation7 + $0x38] sm:$0xff]
        %v637 = vld [vmem:[#allocation7 + $0x40] sm:$0xff]
        %v638 = vld [vmem:[#allocation7 + $0x48] sm:$0xff]
        %v639 = vld [vmem:[#allocation7 + $0x50] sm:$0xff]
        %v640 = vld [vmem:[#allocation7 + $0x58] sm:$0xff]
        %v641 = vld [vmem:[#allocation7 + $0x60] sm:$0xff]
        %v642 = vld [vmem:[#allocation7 + $0x68] sm:$0xff]
        %v643 = vld [vmem:[#allocation7 + $0x70] sm:$0xff]
        %v644 = vld [vmem:[#allocation7 + $0x78] sm:$0xff]
        %v645 = vld [vmem:[%s5] sm:$0x1]
        %v647 = vlaneseq
        %v648 = vshrl.u32 %v647, 7
        %v649 = vsub.s32 0, %v648
        %v650 = vrot.slane %v645, %v649
        %652 = vmatprep.subr.mxu0 0.0
        %653 = vmatpush1.msra.mxu0 %v629
        %654 = vmatprep.subr.mxu0 0.0
        %655 = vmatpush1.msra.mxu0 %v630
        %656 = vmatprep.subr.mxu0 0.0
        %657 = vmatpush1.msra.mxu0 %v631
        %658 = vmatprep.subr.mxu0 0.0
        %659 = vmatpush1.msra.mxu0 %v632
        %660 = vmatprep.subr.mxu0 0.0
        %661 = vmatpush1.msra.mxu0 %v633
        %662 = vmatprep.subr.mxu0 0.0
        %663 = vmatpush1.msra.mxu0 %v634
        %664 = vmatprep.subr.mxu0 0.0
        %665 = vmatpush1.msra.mxu0 %v635
        %666 = vmatprep.subr.mxu0 0.0
        %667 = vmatpush1.msra.mxu0 %v636
        %668 = vmatprep.subr.mxu0 0.0
        %669 = vmatpush1.msra.mxu0 %v637
        %670 = vmatprep.subr.mxu0 0.0
        %671 = vmatpush1.msra.mxu0 %v638
        %672 = vmatprep.subr.mxu0 0.0
        %673 = vmatpush1.msra.mxu0 %v639
        %674 = vmatprep.subr.mxu0 0.0
        %675 = vmatpush1.msra.mxu0 %v640
        %676 = vmatprep.subr.mxu0 0.0
        %677 = vmatpush1.msra.mxu0 %v641
        %678 = vmatprep.subr.mxu0 0.0
        %679 = vmatpush1.msra.mxu0 %v642
        %680 = vmatprep.subr.mxu0 0.0
        %681 = vmatpush1.msra.mxu0 %v643
        %682 = vmatprep.subr.mxu0 0.0
        %683 = vmatpush1.msra.mxu0 %v644
        %684 = vmatprep.subr.mxu0 0.0
        %685 = vmatpush1.msra.mxu0 0.0
        %686 = vmatprep.subr.mxu0 0.0
        %687 = vmatpush1.msra.mxu0 0.0
        %688 = vmatprep.subr.mxu0 0.0
        %689 = vmatpush1.msra.mxu0 0.0
        %690 = vmatprep.subr.mxu0 0.0
        %691 = vmatpush1.msra.mxu0 0.0
        %692 = vmatprep.subr.mxu0 0.0
        %693 = vmatpush1.msra.mxu0 0.0
        %694 = vmatprep.subr.mxu0 0.0
        %695 = vmatpush1.msra.mxu0 0.0
        %696 = vmatprep.subr.mxu0 0.0
        %697 = vmatpush1.msra.mxu0 0.0
        %698 = vmatprep.subr.mxu0 0.0
        %699 = vmatpush1.msra.mxu0 0.0
        %700 = vmatprep.subr.mxu0 0.0
        %701 = vmatpush1.msra.mxu0 0.0
        %702 = vmatprep.subr.mxu0 0.0
        %703 = vmatpush1.msra.mxu0 0.0
        %704 = vmatprep.subr.mxu0 0.0
        %705 = vmatpush1.msra.mxu0 0.0
        %706 = vmatprep.subr.mxu0 0.0
        %707 = vmatpush1.msra.mxu0 0.0
        %708 = vmatprep.subr.mxu0 0.0
        %709 = vmatpush1.msra.mxu0 0.0
        %710 = vmatprep.subr.mxu0 0.0
        %711 = vmatpush1.msra.mxu0 0.0
        %712 = vmatprep.subr.mxu0 0.0
        %713 = vmatpush1.msra.mxu0 0.0
        %714 = vmatprep.subr.mxu0 0.0
        %715 = vmatpush1.msra.mxu0 0.0
        %716 = vmatprep.mubr.f32.mxu0 0.0
        %717 = vmatmul.mubr.f32.gmra.mrb[0].mxu0 %v613
        %v718 = vpop.f32.mrb[0].mxu0
        %v719 = vadd.f32 %v650, %v718
        %v720 = vpop.f32.mrb[0].mxu0
        %721 = vmatprep.mubr.f32.mxu0 0.0
        %722 = vmatmul.mubr.f32.gmra.mrb[0].mxu0 %v614
        %v723 = vpop.f32.mrb[0].mxu0
        %v724 = vadd.f32 %v650, %v723
        %v725 = vpop.f32.mrb[0].mxu0
        %726 = vmatprep.mubr.f32.mxu0 0.0
        %727 = vmatmul.mubr.f32.gmra.mrb[0].mxu0 %v615
        %v728 = vpop.f32.mrb[0].mxu0
        %v729 = vadd.f32 %v650, %v728
        %v730 = vpop.f32.mrb[0].mxu0
        %731 = vmatprep.mubr.f32.mxu0 0.0
        %732 = vmatmul.mubr.f32.gmra.mrb[0].mxu0 %v616
        %v733 = vpop.f32.mrb[0].mxu0
        %v734 = vadd.f32 %v650, %v733
        %v735 = vpop.f32.mrb[0].mxu0
        %736 = vmatprep.mubr.f32.mxu0 0.0
        %737 = vmatmul.mubr.f32.gmra.mrb[0].mxu0 %v617
        %v738 = vpop.f32.mrb[0].mxu0
        %v739 = vadd.f32 %v650, %v738
        %v740 = vpop.f32.mrb[0].mxu0
        %741 = vmatprep.mubr.f32.mxu0 0.0
        %742 = vmatmul.mubr.f32.gmra.mrb[0].mxu0 %v618
        %v743 = vpop.f32.mrb[0].mxu0
        %v744 = vadd.f32 %v650, %v743
        %v745 = vpop.f32.mrb[0].mxu0
        %746 = vmatprep.mubr.f32.mxu0 0.0
        %747 = vmatmul.mubr.f32.gmra.mrb[0].mxu0 %v619
        %v748 = vpop.f32.mrb[0].mxu0
        %v749 = vadd.f32 %v650, %v748
        %v750 = vpop.f32.mrb[0].mxu0
        %751 = vmatprep.mubr.f32.mxu0 0.0
        %752 = vmatmul.mubr.f32.gmra.mrb[0].mxu0 %v620
        %v753 = vpop.f32.mrb[0].mxu0
        %v754 = vadd.f32 %v650, %v753
        %v755 = vpop.f32.mrb[0].mxu0
        %756 = vmatprep.mubr.f32.mxu0 0.0
        %757 = vmatmul.mubr.f32.gmra.mrb[0].mxu0 %v621
        %v758 = vpop.f32.mrb[0].mxu0
        %v759 = vadd.f32 %v650, %v758
        %v760 = vpop.f32.mrb[0].mxu0
        %761 = vmatprep.mubr.f32.mxu0 0.0
        %762 = vmatmul.mubr.f32.gmra.mrb[0].mxu0 %v622
        %v763 = vpop.f32.mrb[0].mxu0
        %v764 = vadd.f32 %v650, %v763
        %v765 = vpop.f32.mrb[0].mxu0
        %766 = vmatprep.mubr.f32.mxu0 0.0
        %767 = vmatmul.mubr.f32.gmra.mrb[0].mxu0 %v623
        %v768 = vpop.f32.mrb[0].mxu0
        %v769 = vadd.f32 %v650, %v768
        %v770 = vpop.f32.mrb[0].mxu0
        %771 = vmatprep.mubr.f32.mxu0 0.0
        %772 = vmatmul.mubr.f32.gmra.mrb[0].mxu0 %v624
        %v773 = vpop.f32.mrb[0].mxu0
        %v774 = vadd.f32 %v650, %v773
        %v775 = vpop.f32.mrb[0].mxu0
        %776 = vmatprep.mubr.f32.mxu0 0.0
        %777 = vmatmul.mubr.f32.gmra.mrb[0].mxu0 %v625
        %v778 = vpop.f32.mrb[0].mxu0
        %v779 = vadd.f32 %v650, %v778
        %v780 = vpop.f32.mrb[0].mxu0
        %781 = vmatprep.mubr.f32.mxu0 0.0
        %782 = vmatmul.mubr.f32.gmra.mrb[0].mxu0 %v626
        %v783 = vpop.f32.mrb[0].mxu0
        %v784 = vadd.f32 %v650, %v783
        %v785 = vpop.f32.mrb[0].mxu0
        %786 = vmatprep.mubr.f32.mxu0 0.0
        %787 = vmatmul.mubr.f32.gmra.mrb[0].mxu0 %v627
        %v788 = vpop.f32.mrb[0].mxu0
        %v789 = vadd.f32 %v650, %v788
        %v790 = vpop.f32.mrb[0].mxu0
        %791 = vmatprep.mubr.f32.mxu0 0.0
        %792 = vmatmul.mubr.f32.gmra.mrb[0].mxu0 %v628
        %v793 = vpop.f32.mrb[0].mxu0
        %v794 = vadd.f32 %v650, %v793
        %v795 = vpop.f32.mrb[0].mxu0
        %796 = vdwg.mxu0
        %v797 = vadd.f32 %v262, %v719
        %v798 = vadd.f32 %v263, %v724
        %v799 = vadd.f32 %v264, %v729
        %v800 = vadd.f32 %v265, %v734
        %v801 = vadd.f32 %v266, %v739
        %v802 = vadd.f32 %v267, %v744
        %v803 = vadd.f32 %v268, %v749
        %v804 = vadd.f32 %v269, %v754
        %v805 = vadd.f32 %v270, %v759
        %v806 = vadd.f32 %v271, %v764
        %v807 = vadd.f32 %v272, %v769
        %v808 = vadd.f32 %v273, %v774
        %v809 = vadd.f32 %v274, %v779
        %v810 = vadd.f32 %v275, %v784
        %v811 = vadd.f32 %v276, %v789
        %v812 = vadd.f32 %v277, %v794
        %813 = vst [vmem:[%s259] sm:$0xff] %v797
        %814 = vst [vmem:[%s259 + $0x8] sm:$0xff] %v798
        %815 = vst [vmem:[%s259 + $0x10] sm:$0xff] %v799
        %816 = vst [vmem:[%s259 + $0x18] sm:$0xff] %v800
        %817 = vst [vmem:[%s259 + $0x20] sm:$0xff] %v801
        %818 = vst [vmem:[%s259 + $0x28] sm:$0xff] %v802
        %819 = vst [vmem:[%s259 + $0x30] sm:$0xff] %v803
        %820 = vst [vmem:[%s259 + $0x38] sm:$0xff] %v804
        %821 = vst [vmem:[%s259 + $0x40] sm:$0xff] %v805
        %822 = vst [vmem:[%s259 + $0x48] sm:$0xff] %v806
        %823 = vst [vmem:[%s259 + $0x50] sm:$0xff] %v807
        %824 = vst [vmem:[%s259 + $0x58] sm:$0xff] %v808
        %825 = vst [vmem:[%s259 + $0x60] sm:$0xff] %v809
        %826 = vst [vmem:[%s259 + $0x68] sm:$0xff] %v810
        %827 = vst [vmem:[%s259 + $0x70] sm:$0xff] %v811
        %828 = vst [vmem:[%s259 + $0x78] sm:$0xff] %v812
        %s829 = sand.u32 %s143, 1
        %s830 = scalar_lea.sflag [#allocation6], %s829
        %s831 = sand.u32 %s143, 1
        %s832 = smul.addr %s831, 128
        %s833 = scalar_lea.vmem [#allocation9], %s832
        // Predicated region
        $region49: #{tpu_custom_call.1} parent=39 // pred_check
          %p834 = pneg %p153
        $region50: #{tpu_custom_call.1} parent=39 // pred_check_branch
          %836 = sbr.rel (%p834) target = $region52
        $region51: #{tpu_custom_call.1} parent=39 // pred_region
          %s837 = smul.u32 16, %s25
          %s839 = ssub.s32 2048, 2048
          %840 = vsyncadd %s830, %s839
          %s841 = smul.addr %s837, 128
          %s842 = scalar_lea.hbm %s6, %s841
          %s843 = sshll.u32 %s833, 4
          %s844 = int_to_ptr.vmem [resolvable:$true] %s843
          %849 = dma.vmem_to_hbm [thread:$0]  %s844, 2048, %s842, %s830, 128, 128, 8
        $region52: #{tpu_custom_call.1} parent=39 // pred_fallthru
          _
      $region40: #{tpu_custom_call.1} parent=5 // pred_fallthru
        _
      %p850 = scmp.le.s32.totalorder 2, %s20
      // Predicated region
      $region53: #{tpu_custom_call.1} parent=5 // pred_check
        %p851 = pneg %p850
      $region54: #{tpu_custom_call.1} parent=5 // pred_check_branch
        %853 = sbr.rel (%p851) target = $region56
      $region55: #{tpu_custom_call.1} parent=5 // pred_region
        %s854 = ssub.s32 %s20, 2
        // Predicated region
        $region57: #{tpu_custom_call.1} parent=55 // pred_check
          %p855 = pneg %p159
        $region58: #{tpu_custom_call.1} parent=55 // pred_check_branch
          %857 = sbr.rel (%p855) target = $region60
        $region59: #{tpu_custom_call.1} parent=55 // pred_region
          %s858 = sand.u32 %s144, 1
          %s859 = scalar_lea.sflag [#allocation6], %s858
          %s860 = sand.u32 %s144, 1
          %s861 = smul.addr %s860, 128
          %s862 = scalar_lea.vmem [#allocation9], %s861
          %863 = dma.done %s859, 2048
        $region60: #{tpu_custom_call.1} parent=55 // pred_fallthru
          _
      $region56: #{tpu_custom_call.1} parent=5 // pred_fallthru
        _
    $region6: #{tpu_custom_call.1} parent=1 // loop_footer
      %s24 = sadd.s32 1, %s20
    $region7: #{tpu_custom_call.1} parent=1 // loop_footer_branch
      %19 = sbr.rel target = $region3
    $region8: #{tpu_custom_call.1} parent=1 // loop_exit
      _
    %864 = vsyncpa [#allocation5], 1
    %s865 = scalar_lea.sflag [#allocation5], 1
    %866 = vsyncpa %s865, 1
    %867 = vsyncpa [#allocation8], 1
    %868 = vsyncpa [#allocation6], 1
    %s869 = scalar_lea.sflag [#allocation6], 1
    %870 = vsyncpa %s869, 1

</llo_original>
